<compile_context>
chip_gen: v6e
topology: v6e:2x2x1
jax: 0.10.0
libtpu: 0.0.40
codegen_flags: <defaults>
</compile_context>

<pallas_src>
import jax
import jax.numpy as jnp
from jax.experimental import pallas as pl
from jax.experimental.pallas import tpu as pltpu


def _round_up(x, m):
    return ((x + m - 1) // m) * m


def decoder_y_kernel(x_ref, w_ref, b_ref, o_ref):
    # x tile arrives as f32; ReLU on the VPU, cast to bf16 for the MXU feed.
    x = jnp.maximum(x_ref[...], 0.0).astype(jnp.bfloat16)
    # bf16 x bf16 matmul, f32 accumulation; bias add in f32.
    logits = jnp.dot(x, w_ref[...], preferred_element_type=jnp.float32) + b_ref[...]
    # Numerically stable log_softmax along the last axis (= PyTorch dim=1).
    # Padded y-columns carry bias = -1e30 -> exp underflows to 0, so they never
    # contribute to the max or the sum.
    m = jnp.max(logits, axis=-1, keepdims=True)
    z = logits - m
    lse = jnp.log(jnp.sum(jnp.exp(z), axis=-1, keepdims=True))
    o_ref[...] = (z - lse).astype(o_ref.dtype)


def prepare_params(weight, bias):
    """One-time prep: transpose, pad the y axis to a 128-multiple, cast weight to bf16.

    weight: (y_dim, in_dim) PyTorch layout; bias: (y_dim,).
    Returns (w_t (in_dim, y_p) bf16, bias (1, y_p) f32). Padded y-columns get
    zero weight and bias = -1e30 so log_softmax ignores them.
    """
    y_dim, in_dim = weight.shape
    y_p = _round_up(y_dim, 128)
    w_t = jnp.zeros((in_dim, y_p), jnp.bfloat16)
    w_t = w_t.at[:, :y_dim].set(weight.T.astype(jnp.bfloat16))
    b_p = jnp.full((1, y_p), -1e30, jnp.float32)
    b_p = b_p.at[0, :y_dim].set(bias.astype(jnp.float32))
    return w_t, b_p


def _choose_tb(B):
    b8 = _round_up(max(B, 8), 8)
    if b8 <= 16:
        return b8
    # >= 2 grid blocks so v7x's two TensorCores both get work; multiple of 16 for
    # bf16 sublane packing of the MXU LHS; cap at 256 to keep the plan v7x-friendly.
    return min(256, _round_up(pl.cdiv(b8, 2), 16))


def decoder_y_forward(x, w_t, b_p, y_dim, out_dtype=jnp.float32):
    """x: (B, in_dim) f32; w_t: (in_dim, y_p) bf16; b_p: (1, y_p) f32."""
    B, in_dim = x.shape
    in_dim_w, y_p = w_t.shape
    assert in_dim_w == in_dim
    out_bytes = jnp.dtype(out_dtype).itemsize

    TB = _choose_tb(B)

    # Generation-aware VMEM budget: ~75% of physical (64 MiB on v7x, 128 MiB v5e/v6e).
    try:
        vmem_cap = int(pltpu.get_tpu_info().vmem_capacity_bytes)
    except Exception:
        vmem_cap = 64 << 20  # conservative (v7x) default if the query is unavailable
    vmem_budget = int(vmem_cap * 0.75)

    def vmem_estimate(tb, resident_bufs):
        return (2 * tb * in_dim * 4              # x tiles (f32, double-buffered)
                + 2 * tb * y_p * out_bytes       # out tiles (double-buffered)
                + resident_bufs * in_dim * y_p * 2   # resident bf16 weight
                + resident_bufs * y_p * 4)           # resident bias

    # Shrink TB (not the weight residency) if the plan would blow the VMEM budget.
    while TB > 16 and vmem_estimate(TB, 1) > vmem_budget:
        TB = max(16, _round_up(TB // 2, 16))
    # TODO(synk): for vocabulary-sized y_dim the resident weight alone can exceed the
    # budget; that needs a y-tiled grid with an online-logsumexp accumulator.

    grid = (pl.cdiv(B, TB),)

    cost = pl.CostEstimate(
        flops=2 * B * in_dim * y_p + 6 * B * y_p,
        transcendentals=B * y_p + B,
        bytes_accessed=B * in_dim * 4 + in_dim * y_p * 2 + y_p * 4 + B * y_p * out_bytes,
    )

    def build_call(single_buffer_resident):
        res_kw = {"pipeline_mode": pl.Buffered(1)} if single_buffer_resident else {}
        resident_bufs = 1 if single_buffer_resident else 2
        vmem_limit = min(
            max(int(vmem_estimate(TB, resident_bufs) * 1.5) + (2 << 20), 4 << 20),
            vmem_budget,
        )
        return pl.pallas_call(
            decoder_y_kernel,
            out_shape=jax.ShapeDtypeStruct((B, y_p), out_dtype),
            grid=grid,
            in_specs=[
                pl.BlockSpec((TB, in_dim), lambda i: (i, 0)),             # x: batch-tiled f32
                pl.BlockSpec((in_dim, y_p), lambda i: (0, 0), **res_kw),  # weight: resident
                pl.BlockSpec((1, y_p), lambda i: (0, 0), **res_kw),       # bias: resident
            ],
            out_specs=pl.BlockSpec((TB, y_p), lambda i: (i, 0)),
            compiler_params=pltpu.CompilerParams(
                dimension_semantics=("parallel",),
                vmem_limit_bytes=vmem_limit,
            ),
            cost_estimate=cost,
        )

    try:
        out_p = build_call(True)(x, w_t, b_p)
    except Exception:
        # pipeline_mode / Buffered(1) unsupported on this jax version -> default buffering.
        out_p = build_call(False)(x, w_t, b_p)

    if y_p == y_dim:
        return out_p
    return out_p[:, :y_dim]


def init_params(key, in_dim, y_dim):
    # nn.Linear default init: U(-1/sqrt(in_dim), 1/sqrt(in_dim))
    k_w, k_b = jax.random.split(key)
    bound = 1.0 / (in_dim ** 0.5)
    weight = jax.random.uniform(k_w, (y_dim, in_dim), jnp.float32, -bound, bound)
    bias = jax.random.uniform(k_b, (y_dim,), jnp.float32, -bound, bound)
    return weight, bias


if __name__ == "__main__":
    key = jax.random.PRNGKey(0)
    k_x, k_p = jax.random.split(key)

    B, in_dim, y_dim = 8, 32, 16
    x = jax.random.normal(k_x, (B, in_dim), jnp.float32)
    weight, bias = init_params(k_p, in_dim, y_dim)

    # One-time parameter prep (transpose + y-pad + bf16) — not in the forward path.
    w_t, b_p = prepare_params(weight, bias)

    out = decoder_y_forward(x, w_t, b_p, y_dim)
    jax.block_until_ready(out)
    assert out.shape == (B, y_dim)

    # Tight check vs a reference that uses the same bf16 MXU feed.
    xb = jnp.maximum(x, 0.0).astype(jnp.bfloat16)
    wb = weight.T.astype(jnp.bfloat16)
    ref_logits = jnp.dot(xb, wb, preferred_element_type=jnp.float32) + bias
    ref = jax.nn.log_softmax(ref_logits, axis=1)
    assert jnp.allclose(out, ref, atol=2e-3), "mismatch vs bf16-feed reference"

    # Loose check vs the full-f32 PyTorch-equivalent reference.
    ref32 = jax.nn.log_softmax(jnp.maximum(x, 0.0) @ weight.T + bias, axis=1)
    assert jnp.allclose(out, ref32, atol=5e-2), "mismatch vs f32 reference"

    print("KERNEL_OK")
</pallas_src>

<mosaic_0001>
module attributes {stable_mosaic.version = 11 : i64} {
  func.func @decoder_y_kernel(%arg0: i32, %arg1: memref<8x32xf32, #tpu.memory_space<vmem>>, %arg2: memref<32x128xbf16, #tpu.memory_space<vmem>>, %arg3: memref<1x128xf32, #tpu.memory_space<vmem>>, %arg4: memref<8x128xf32, #tpu.memory_space<vmem>>) attributes {dimension_semantics = [#tpu.dimension_semantics<parallel>], iteration_bounds = array<i64: 1>, scalar_prefetch = 0 : i64, scratch_operands = 0 : i64, tpu.core_type = #tpu.core_type<tc>, window_params = [{transform_indices = @transform_0, window_bounds = array<i64: 8, 32>}, {pipeline_mode = #tpu.pipeline_mode<synchronous>, transform_indices = @transform_1, window_bounds = array<i64: 32, 128>}, {pipeline_mode = #tpu.pipeline_mode<synchronous>, transform_indices = @transform_2, window_bounds = array<i64: 1, 128>}, {transform_indices = @transform_3, window_bounds = array<i64: 8, 128>}]} {
    %c0 = arith.constant 0 : index
    %c0_0 = arith.constant 0 : index
    %0 = vector.load %arg1[%c0, %c0_0] : memref<8x32xf32, #tpu.memory_space<vmem>>, vector<8x32xf32>
    %cst = arith.constant 0.000000e+00 : f32
    %1 = vector.broadcast %cst : f32 to vector<8x32xf32>
    %2 = arith.maximumf %0, %1 : vector<8x32xf32>
    %3 = arith.truncf %2 : vector<8x32xf32> to vector<8x32xbf16>
    %c0_1 = arith.constant 0 : index
    %c0_2 = arith.constant 0 : index
    %4 = vector.load %arg2[%c0_1, %c0_2] : memref<32x128xbf16, #tpu.memory_space<vmem>>, vector<32x128xbf16>
    %cst_3 = arith.constant dense<0.000000e+00> : vector<8x128xf32>
    %5 = tpu.matmul %3, %4, %cst_3 {dimension_numbers = #tpu.dot_dimension_numbers<[1], [0], [0], [1], [0, 0, 1, 1], [], []>} : vector<8x32xbf16>, vector<32x128xbf16>, vector<8x128xf32> -> vector<8x128xf32>
    %c0_4 = arith.constant 0 : index
    %c0_5 = arith.constant 0 : index
    %6 = vector.load %arg3[%c0_4, %c0_5] : memref<1x128xf32, #tpu.memory_space<vmem>>, vector<1x128xf32>
    %7 = vector.broadcast %6 : vector<1x128xf32> to vector<8x128xf32>
    %8 = arith.addf %5, %7 : vector<8x128xf32>
    %cst_6 = arith.constant dense<0xFF800000> : vector<8xf32>
    %9 = vector.multi_reduction <maximumf>, %8, %cst_6 [1] : vector<8x128xf32> to vector<8xf32>
    %10 = vector.shape_cast %9 : vector<8xf32> to vector<8x1xf32>
    %11 = vector.broadcast %10 : vector<8x1xf32> to vector<8x128xf32>
    %12 = arith.subf %8, %11 : vector<8x128xf32>
    %13 = math.exp %12 : vector<8x128xf32>
    %cst_7 = arith.constant dense<0.000000e+00> : vector<8xf32>
    %14 = vector.multi_reduction <add>, %13, %cst_7 [1] : vector<8x128xf32> to vector<8xf32>
    %15 = vector.shape_cast %14 : vector<8xf32> to vector<8x1xf32>
    %16 = math.log %15 : vector<8x1xf32>
    %17 = vector.broadcast %16 : vector<8x1xf32> to vector<8x128xf32>
    %18 = arith.subf %12, %17 : vector<8x128xf32>
    %c0_8 = arith.constant 0 : index
    %c0_9 = arith.constant 0 : index
    %19 = vector.load %arg4[%c0_8, %c0_9] : memref<8x128xf32, #tpu.memory_space<vmem>>, vector<8x128xf32>
    tpu.vector_store %arg4[%c0_8, %c0_9], %18 {strides = array<i32>} : memref<8x128xf32, #tpu.memory_space<vmem>>, vector<8x128xf32>,
    return
  }
  func.func @transform_0(%arg0: i32) -> (i32, i32) {
    %c0_i32 = arith.constant 0 : i32
    %c0_i32_0 = arith.constant 0 : i32
    return %arg0, %c0_i32 : i32, i32
  }
  func.func @transform_1(%arg0: i32) -> (i32, i32) {
    %c0_i32 = arith.constant 0 : i32
    %c0_i32_0 = arith.constant 0 : i32
    %c0_i32_1 = arith.constant 0 : i32
    return %c0_i32, %c0_i32_0 : i32, i32
  }
  func.func @transform_2(%arg0: i32) -> (i32, i32) {
    %c0_i32 = arith.constant 0 : i32
    %c0_i32_0 = arith.constant 0 : i32
    %c0_i32_1 = arith.constant 0 : i32
    return %c0_i32, %c0_i32_0 : i32, i32
  }
  func.func @transform_3(%arg0: i32) -> (i32, i32) {
    %c0_i32 = arith.constant 0 : i32
    %c0_i32_0 = arith.constant 0 : i32
    return %arg0, %c0_i32 : i32, i32
  }
}

module attributes {stable_mosaic.version = 11 : i64} {
  func.func @decoder_y_kernel(%arg0: i32, %arg1: memref<8x32xf32, #tpu.memory_space<vmem>>, %arg2: memref<32x128xbf16, #tpu.memory_space<vmem>>, %arg3: memref<1x128xf32, #tpu.memory_space<vmem>>, %arg4: memref<8x128xf32, #tpu.memory_space<vmem>>) attributes {dimension_semantics = [#tpu.dimension_semantics<parallel>], iteration_bounds = array<i64: 1>, scalar_prefetch = 0 : i64, scratch_operands = 0 : i64, tpu.core_type = #tpu.core_type<tc>, window_params = [{transform_indices = @transform_0, window_bounds = array<i64: 8, 32>}, {pipeline_mode = #tpu.pipeline_mode<synchronous>, transform_indices = @transform_1, window_bounds = array<i64: 32, 128>}, {pipeline_mode = #tpu.pipeline_mode<synchronous>, transform_indices = @transform_2, window_bounds = array<i64: 1, 128>}, {transform_indices = @transform_3, window_bounds = array<i64: 8, 128>}]} {
    %c0 = arith.constant 0 : index
    %c0_0 = arith.constant 0 : index
    %0 = vector.load %arg1[%c0, %c0_0] : memref<8x32xf32, #tpu.memory_space<vmem>>, vector<8x32xf32>
    %cst = arith.constant 0.000000e+00 : f32
    %1 = vector.broadcast %cst : f32 to vector<8x32xf32>
    %2 = arith.maximumf %0, %1 : vector<8x32xf32>
    %3 = arith.truncf %2 : vector<8x32xf32> to vector<8x32xbf16>
    %c0_1 = arith.constant 0 : index
    %c0_2 = arith.constant 0 : index
    %4 = vector.load %arg2[%c0_1, %c0_2] : memref<32x128xbf16, #tpu.memory_space<vmem>>, vector<32x128xbf16>
    %cst_3 = arith.constant dense<0.000000e+00> : vector<8x128xf32>
    %5 = tpu.matmul %3, %4, %cst_3 {dimension_numbers = #tpu.dot_dimension_numbers<[1], [0], [0], [1], [0, 0, 1, 1], [], []>} : vector<8x32xbf16>, vector<32x128xbf16>, vector<8x128xf32> -> vector<8x128xf32>
    %c0_4 = arith.constant 0 : index
    %c0_5 = arith.constant 0 : index
    %6 = vector.load %arg3[%c0_4, %c0_5] : memref<1x128xf32, #tpu.memory_space<vmem>>, vector<1x128xf32>
    %7 = vector.broadcast %6 : vector<1x128xf32> to vector<8x128xf32>
    %8 = arith.addf %5, %7 : vector<8x128xf32>
    %cst_6 = arith.constant dense<0xFF800000> : vector<8xf32>
    %9 = vector.multi_reduction <maximumf>, %8, %cst_6 [1] : vector<8x128xf32> to vector<8xf32>
    %10 = vector.shape_cast %9 : vector<8xf32> to vector<8x1xf32>
    %11 = vector.broadcast %10 : vector<8x1xf32> to vector<8x128xf32>
    %12 = arith.subf %8, %11 : vector<8x128xf32>
    %13 = math.exp %12 : vector<8x128xf32>
    %cst_7 = arith.constant dense<0.000000e+00> : vector<8xf32>
    %14 = vector.multi_reduction <add>, %13, %cst_7 [1] : vector<8x128xf32> to vector<8xf32>
    %15 = vector.shape_cast %14 : vector<8xf32> to vector<8x1xf32>
    %16 = math.log %15 : vector<8x1xf32>
    %17 = vector.broadcast %16 : vector<8x1xf32> to vector<8x128xf32>
    %18 = arith.subf %12, %17 : vector<8x128xf32>
    %c0_8 = arith.constant 0 : index
    %c0_9 = arith.constant 0 : index
    %19 = vector.load %arg4[%c0_8, %c0_9] : memref<8x128xf32, #tpu.memory_space<vmem>>, vector<8x128xf32>
    tpu.vector_store %arg4[%c0_8, %c0_9], %18 {strides = array<i32>} : memref<8x128xf32, #tpu.memory_space<vmem>>, vector<8x128xf32>,
    return
  }
  func.func @transform_0(%arg0: i32) -> (i32, i32) {
    %c0_i32 = arith.constant 0 : i32
    %c0_i32_0 = arith.constant 0 : i32
    return %arg0, %c0_i32 : i32, i32
  }
  func.func @transform_1(%arg0: i32) -> (i32, i32) {
    %c0_i32 = arith.constant 0 : i32
    %c0_i32_0 = arith.constant 0 : i32
    %c0_i32_1 = arith.constant 0 : i32
    return %c0_i32, %c0_i32_0 : i32, i32
  }
  func.func @transform_2(%arg0: i32) -> (i32, i32) {
    %c0_i32 = arith.constant 0 : i32
    %c0_i32_0 = arith.constant 0 : i32
    %c0_i32_1 = arith.constant 0 : i32
    return %c0_i32, %c0_i32_0 : i32, i32
  }
  func.func @transform_3(%arg0: i32) -> (i32, i32) {
    %c0_i32 = arith.constant 0 : i32
    %c0_i32_0 = arith.constant 0 : i32
    return %arg0, %c0_i32 : i32, i32
  }
}

</mosaic_0001>

<llo_original>
// kernel: tpu_custom_call.1
$region0: #{tpu_custom_call.1}
  #allocation0 [shape = 'u32[]', space=smem, size = 0x4, offset = 0x4, fixed_abs, tag = 'smem constant byte address 0x4 - core index']
  #allocation1 [shape = 'u32[144,128]{1,0:T(1,128)}', space=vmem, size = 0x12000, scoped, tag = 'internal scratch']
  %s0 = inlined_call_operand.hbm [shape: f32[8,32], index: 0, kind: input, shape index: {}]
  %s1 = inlined_call_operand.hbm [shape: bf16[32,128], index: 1, kind: input, shape index: {}]
  %s2 = inlined_call_operand.vmem [shape: f32[1,128], index: 2, kind: input, shape index: {}]
  %s3 = inlined_call_operand.hbm [shape: f32[8,128], index: 3, kind: output, shape index: {}]
  %s4 = sld [smem:[#allocation0]]
  $region30: #{tpu_custom_call.1} parent=0
    _
  %s6 = ssub.s32 1, %s4
  %s7 = scalar_select 0, %s6, %s4
  $region1: #{tpu_custom_call.1} parent=0
    #allocation2 [shape = 'u8[4096]{0}', space=vmem, size = 0x1000, scoped, tag = 'input window, operand 0, single buffered']
    #allocation3 [shape = 's32[1]{0}', space=sflag, size = 0x4, scoped, tag = 'scoped memory for tpu_custom_call.1']
    #allocation4 [shape = 's32[1]{0}', space=sflag, size = 0x4, scoped, tag = 'scoped memory for tpu_custom_call.1']
    #allocation5 [shape = 'u8[8192]{0}', space=vmem, size = 0x2000, scoped, tag = 'input window, operand 1, single buffered']
    #allocation6 [shape = 's32[1]{0}', space=sflag, size = 0x4, scoped, tag = 'scoped memory for tpu_custom_call.1']
    #allocation7 [shape = 'u8[4096]{0}', space=vmem, size = 0x1000, scoped, tag = 'output window, operand 0, single buffered']
    %8 = vsyncpa [#allocation3], 0
    %9 = vsyncpa [#allocation6], 0
    %10 = vsyncpa [#allocation4], 0
    // Predicated region
    $region2: #{tpu_custom_call.1} parent=1 // pred_check
      _
    $region3: #{tpu_custom_call.1} parent=1 // pred_check_branch
      %12 = sbr.rel (0) target = $region5
    $region4: #{tpu_custom_call.1} parent=1 // pred_region
      %s14 = ssub.s32 128, 128
      %15 = vsyncadd [#allocation3], %s14
      %s17 = sshll.u32 [#allocation2], 4
      %s18 = int_to_ptr.vmem [resolvable:$true] %s17
      %20 = dma.hbm_to_vmem [thread:$0]  %s0, 128, %s18, [#allocation3]
    $region5: #{tpu_custom_call.1} parent=1 // pred_fallthru
      _
    // Predicated region
    $region6: #{tpu_custom_call.1} parent=1 // pred_check
      _
    $region7: #{tpu_custom_call.1} parent=1 // pred_check_branch
      %22 = sbr.rel (0) target = $region9
    $region8: #{tpu_custom_call.1} parent=1 // pred_region
      %s24 = ssub.s32 256, 256
      %25 = vsyncadd [#allocation6], %s24
      %s26 = sshll.u32 [#allocation5], 4
      %s27 = int_to_ptr.vmem [resolvable:$true] %s26
      %32 = dma.hbm_to_vmem [thread:$0]  %s1, 256, %s27, [#allocation6], 64, 64, 4
    $region9: #{tpu_custom_call.1} parent=1 // pred_fallthru
      _
    // Predicated region
    $region10: #{tpu_custom_call.1} parent=1 // pred_check
      _
    $region11: #{tpu_custom_call.1} parent=1 // pred_check_branch
      %34 = sbr.rel (0) target = $region13
    $region12: #{tpu_custom_call.1} parent=1 // pred_region
      _
    $region13: #{tpu_custom_call.1} parent=1 // pred_fallthru
      _
    // Predicated region
    $region14: #{tpu_custom_call.1} parent=1 // pred_check
      _
    $region15: #{tpu_custom_call.1} parent=1 // pred_check_branch
      %36 = sbr.rel (0) target = $region17
    $region16: #{tpu_custom_call.1} parent=1 // pred_region
      %37 = dma.done [#allocation3], 128
    $region17: #{tpu_custom_call.1} parent=1 // pred_fallthru
      _
    // Predicated region
    $region18: #{tpu_custom_call.1} parent=1 // pred_check
      _
    $region19: #{tpu_custom_call.1} parent=1 // pred_check_branch
      %39 = sbr.rel (0) target = $region21
    $region20: #{tpu_custom_call.1} parent=1 // pred_region
      %40 = dma.done [#allocation6], 256
    $region21: #{tpu_custom_call.1} parent=1 // pred_fallthru
      _
    %v42 = vld [vmem:[#allocation2] sm:$0xff]
    %v43 = vmax.f32 %v42, 0.0
    %v44 = vpack.c.bf16 %v43, %v43
    %v45 = vld [vmem:[#allocation5] sm:$0xf]
    %v46 = vld [vmem:[#allocation5 + $0x4] sm:$0xf]
    %v47 = vld [vmem:[#allocation5 + $0x8] sm:$0xf]
    %v48 = vld [vmem:[#allocation5 + $0xc] sm:$0xf]
    %v49 = vld [vmem:[%s2] sm:$0x1]
    %v51 = vlaneseq
    %v52 = vshrl.u32 %v51, 7
    %v53 = vsub.s32 0, %v52
    %v54 = vrot.slane %v49, %v53
    %v60 = vunpack.c.l.b16 %v45
    %v61 = vunpack.c.l.b16 %v46
    %v62 = vunpack.c.l.b16 %v47
    %v63 = vunpack.c.l.b16 %v48
    %v64 = vpack.c.b16 %v61, %v60
    %v65 = vpack.c.b16 %v63, %v62
    %vm68 = vcmask 261120
    %v70 = vsel %vm68, %v44, 0
    %72 = vmatprep.subr.bf16.mxu0 0
    %73 = vmatpush1.bf16.msra.mxu0 0
    %74 = vmatprep.subr.bf16.mxu0 0
    %75 = vmatpush1.bf16.msra.mxu0 0
    %76 = vmatprep.subr.bf16.mxu0 0
    %77 = vmatpush1.bf16.msra.mxu0 0
    %78 = vmatprep.subr.bf16.mxu0 0
    %79 = vmatpush1.bf16.msra.mxu0 0
    %80 = vmatprep.subr.bf16.mxu0 0
    %81 = vmatpush1.bf16.msra.mxu0 0
    %82 = vmatprep.subr.bf16.mxu0 0
    %83 = vmatpush1.bf16.msra.mxu0 0
    %84 = vmatprep.subr.bf16.mxu0 0
    %85 = vmatpush1.bf16.msra.mxu0 %v65
    %86 = vmatprep.subr.bf16.mxu0 0
    %87 = vmatpush1.bf16.msra.mxu0 %v64
    %88 = vmatprep.subr.bf16.mxu0 0
    %89 = vmatpush2.bf16.msra.mxu0 0
    %90 = vmatprep.subr.bf16.mxu0 0
    %91 = vmatpush2.bf16.msra.mxu0 0
    %92 = vmatprep.subr.bf16.mxu0 0
    %93 = vmatpush2.bf16.msra.mxu0 0
    %94 = vmatprep.subr.bf16.mxu0 0
    %95 = vmatpush2.bf16.msra.mxu0 0
    %96 = vmatprep.subr.bf16.mxu0 0
    %97 = vmatpush2.bf16.msra.mxu0 0
    %98 = vmatprep.subr.bf16.mxu0 0
    %99 = vmatpush2.bf16.msra.mxu0 0
    %100 = vmatprep.subr.bf16.mxu0 0
    %101 = vmatpush2.bf16.msra.mxu0 0
    %102 = vmatprep.subr.bf16.mxu0 0
    %103 = vmatpush2.bf16.msra.mxu0 0
    %104 = vmatprep.mubr.bf16.mxu0 0
    %105 = vmatmul.mubr.bf16.gmra.mxu0 %v70
    %v106 = vpop.f32.mrf.mxu0
    %v107 = vadd.f32 %v54, %v106
    %v108 = vpop.f32.mrf.mxu0
    %v109 = vpop.f32.mrf.mxu0
    %v110 = vpop.f32.mrf.mxu0
    %111 = vdwg.mxu0
    %112 = vmax.xlane.f32.xlu0 %v107
    %v113 = vpop.xlane.xlu0 %112
    %v114 = vsub.f32 %v107, %v113
    %v115 = vmul.f32 %v114, 1.442695
    %v116 = vpow.pop %v115
    %117 = vadd.xlane.f32.xlu0 %v116
    %v118 = vpop.xlane.xlu0 %117
    %v119 = vlog2.pop %v118
    %v120 = vmul.f32 %v119, 0.6931472
    %v121 = vsub.f32 %v114, %v120
    %122 = vst [vmem:[#allocation7] sm:$0xff] %v121
    // Predicated region
    $region22: #{tpu_custom_call.1} parent=1 // pred_check
      _
    $region23: #{tpu_custom_call.1} parent=1 // pred_check_branch
      %124 = sbr.rel (0) target = $region25
    $region24: #{tpu_custom_call.1} parent=1 // pred_region
      %s126 = ssub.s32 128, 128
      %127 = vsyncadd [#allocation4], %s126
      %s129 = sshll.u32 [#allocation7], 4
      %s130 = int_to_ptr.vmem [resolvable:$true] %s129
      %132 = dma.vmem_to_hbm [thread:$0]  %s130, 128, %s3, [#allocation4]
    $region25: #{tpu_custom_call.1} parent=1 // pred_fallthru
      _
    // Predicated region
    $region26: #{tpu_custom_call.1} parent=1 // pred_check
      _
    $region27: #{tpu_custom_call.1} parent=1 // pred_check_branch
      %134 = sbr.rel (0) target = $region29
    $region28: #{tpu_custom_call.1} parent=1 // pred_region
      %135 = dma.done [#allocation4], 128
    $region29: #{tpu_custom_call.1} parent=1 // pred_fallthru
      _
    %136 = vsyncpa [#allocation3], 1
    %137 = vsyncpa [#allocation6], 1
    %138 = vsyncpa [#allocation4], 1

// kernel: tpu_custom_call.1
$region0: #{tpu_custom_call.1}
  #allocation0 [shape = 'u32[]', space=smem, size = 0x4, offset = 0x4, fixed_abs, tag = 'smem constant byte address 0x4 - core index']
  #allocation1 [shape = 'u32[144,128]{1,0:T(1,128)}', space=vmem, size = 0x12000, scoped, tag = 'internal scratch']
  %s0 = inlined_call_operand.hbm [shape: f32[8,32], index: 0, kind: input, shape index: {}]
  %s1 = inlined_call_operand.hbm [shape: bf16[32,128], index: 1, kind: input, shape index: {}]
  %s2 = inlined_call_operand.vmem [shape: f32[1,128], index: 2, kind: input, shape index: {}]
  %s3 = inlined_call_operand.hbm [shape: f32[8,128], index: 3, kind: output, shape index: {}]
  %s4 = sld [smem:[#allocation0]]
  $region30: #{tpu_custom_call.1} parent=0
    _
  %s6 = ssub.s32 1, %s4
  %s7 = scalar_select 0, %s6, %s4
  $region1: #{tpu_custom_call.1} parent=0
    #allocation2 [shape = 'u8[4096]{0}', space=vmem, size = 0x1000, scoped, tag = 'input window, operand 0, single buffered']
    #allocation3 [shape = 's32[1]{0}', space=sflag, size = 0x4, scoped, tag = 'scoped memory for tpu_custom_call.1']
    #allocation4 [shape = 's32[1]{0}', space=sflag, size = 0x4, scoped, tag = 'scoped memory for tpu_custom_call.1']
    #allocation5 [shape = 'u8[8192]{0}', space=vmem, size = 0x2000, scoped, tag = 'input window, operand 1, single buffered']
    #allocation6 [shape = 's32[1]{0}', space=sflag, size = 0x4, scoped, tag = 'scoped memory for tpu_custom_call.1']
    #allocation7 [shape = 'u8[4096]{0}', space=vmem, size = 0x1000, scoped, tag = 'output window, operand 0, single buffered']
    %8 = vsyncpa [#allocation3], 0
    %9 = vsyncpa [#allocation6], 0
    %10 = vsyncpa [#allocation4], 0
    // Predicated region
    $region2: #{tpu_custom_call.1} parent=1 // pred_check
      _
    $region3: #{tpu_custom_call.1} parent=1 // pred_check_branch
      %12 = sbr.rel (0) target = $region5
    $region4: #{tpu_custom_call.1} parent=1 // pred_region
      %s14 = ssub.s32 128, 128
      %15 = vsyncadd [#allocation3], %s14
      %s17 = sshll.u32 [#allocation2], 4
      %s18 = int_to_ptr.vmem [resolvable:$true] %s17
      %20 = dma.hbm_to_vmem [thread:$0]  %s0, 128, %s18, [#allocation3]
    $region5: #{tpu_custom_call.1} parent=1 // pred_fallthru
      _
    // Predicated region
    $region6: #{tpu_custom_call.1} parent=1 // pred_check
      _
    $region7: #{tpu_custom_call.1} parent=1 // pred_check_branch
      %22 = sbr.rel (0) target = $region9
    $region8: #{tpu_custom_call.1} parent=1 // pred_region
      %s24 = ssub.s32 256, 256
      %25 = vsyncadd [#allocation6], %s24
      %s26 = sshll.u32 [#allocation5], 4
      %s27 = int_to_ptr.vmem [resolvable:$true] %s26
      %32 = dma.hbm_to_vmem [thread:$0]  %s1, 256, %s27, [#allocation6], 64, 64, 4
    $region9: #{tpu_custom_call.1} parent=1 // pred_fallthru
      _
    // Predicated region
    $region10: #{tpu_custom_call.1} parent=1 // pred_check
      _
    $region11: #{tpu_custom_call.1} parent=1 // pred_check_branch
      %34 = sbr.rel (0) target = $region13
    $region12: #{tpu_custom_call.1} parent=1 // pred_region
      _
    $region13: #{tpu_custom_call.1} parent=1 // pred_fallthru
      _
    // Predicated region
    $region14: #{tpu_custom_call.1} parent=1 // pred_check
      _
    $region15: #{tpu_custom_call.1} parent=1 // pred_check_branch
      %36 = sbr.rel (0) target = $region17
    $region16: #{tpu_custom_call.1} parent=1 // pred_region
      %37 = dma.done [#allocation3], 128
    $region17: #{tpu_custom_call.1} parent=1 // pred_fallthru
      _
    // Predicated region
    $region18: #{tpu_custom_call.1} parent=1 // pred_check
      _
    $region19: #{tpu_custom_call.1} parent=1 // pred_check_branch
      %39 = sbr.rel (0) target = $region21
    $region20: #{tpu_custom_call.1} parent=1 // pred_region
      %40 = dma.done [#allocation6], 256
    $region21: #{tpu_custom_call.1} parent=1 // pred_fallthru
      _
    %v42 = vld [vmem:[#allocation2] sm:$0xff]
    %v43 = vmax.f32 %v42, 0.0
    %v44 = vpack.c.bf16 %v43, %v43
    %v45 = vld [vmem:[#allocation5] sm:$0xf]
    %v46 = vld [vmem:[#allocation5 + $0x4] sm:$0xf]
    %v47 = vld [vmem:[#allocation5 + $0x8] sm:$0xf]
    %v48 = vld [vmem:[#allocation5 + $0xc] sm:$0xf]
    %v49 = vld [vmem:[%s2] sm:$0x1]
    %v51 = vlaneseq
    %v52 = vshrl.u32 %v51, 7
    %v53 = vsub.s32 0, %v52
    %v54 = vrot.slane %v49, %v53
    %v60 = vunpack.c.l.b16 %v45
    %v61 = vunpack.c.l.b16 %v46
    %v62 = vunpack.c.l.b16 %v47
    %v63 = vunpack.c.l.b16 %v48
    %v64 = vpack.c.b16 %v61, %v60
    %v65 = vpack.c.b16 %v63, %v62
    %vm68 = vcmask 261120
    %v70 = vsel %vm68, %v44, 0
    %72 = vmatprep.subr.bf16.mxu0 0
    %73 = vmatpush1.bf16.msra.mxu0 0
    %74 = vmatprep.subr.bf16.mxu0 0
    %75 = vmatpush1.bf16.msra.mxu0 0
    %76 = vmatprep.subr.bf16.mxu0 0
    %77 = vmatpush1.bf16.msra.mxu0 0
    %78 = vmatprep.subr.bf16.mxu0 0
    %79 = vmatpush1.bf16.msra.mxu0 0
    %80 = vmatprep.subr.bf16.mxu0 0
    %81 = vmatpush1.bf16.msra.mxu0 0
    %82 = vmatprep.subr.bf16.mxu0 0
    %83 = vmatpush1.bf16.msra.mxu0 0
    %84 = vmatprep.subr.bf16.mxu0 0
    %85 = vmatpush1.bf16.msra.mxu0 %v65
    %86 = vmatprep.subr.bf16.mxu0 0
    %87 = vmatpush1.bf16.msra.mxu0 %v64
    %88 = vmatprep.subr.bf16.mxu0 0
    %89 = vmatpush2.bf16.msra.mxu0 0
    %90 = vmatprep.subr.bf16.mxu0 0
    %91 = vmatpush2.bf16.msra.mxu0 0
    %92 = vmatprep.subr.bf16.mxu0 0
    %93 = vmatpush2.bf16.msra.mxu0 0
    %94 = vmatprep.subr.bf16.mxu0 0
    %95 = vmatpush2.bf16.msra.mxu0 0
    %96 = vmatprep.subr.bf16.mxu0 0
    %97 = vmatpush2.bf16.msra.mxu0 0
    %98 = vmatprep.subr.bf16.mxu0 0
    %99 = vmatpush2.bf16.msra.mxu0 0
    %100 = vmatprep.subr.bf16.mxu0 0
    %101 = vmatpush2.bf16.msra.mxu0 0
    %102 = vmatprep.subr.bf16.mxu0 0
    %103 = vmatpush2.bf16.msra.mxu0 0
    %104 = vmatprep.mubr.bf16.mxu0 0
    %105 = vmatmul.mubr.bf16.gmra.mxu0 %v70
    %v106 = vpop.f32.mrf.mxu0
    %v107 = vadd.f32 %v54, %v106
    %v108 = vpop.f32.mrf.mxu0
    %v109 = vpop.f32.mrf.mxu0
    %v110 = vpop.f32.mrf.mxu0
    %111 = vdwg.mxu0
    %112 = vmax.xlane.f32.xlu0 %v107
    %v113 = vpop.xlane.xlu0 %112
    %v114 = vsub.f32 %v107, %v113
    %v115 = vmul.f32 %v114, 1.442695
    %v116 = vpow.pop %v115
    %117 = vadd.xlane.f32.xlu0 %v116
    %v118 = vpop.xlane.xlu0 %117
    %v119 = vlog2.pop %v118
    %v120 = vmul.f32 %v119, 0.6931472
    %v121 = vsub.f32 %v114, %v120
    %122 = vst [vmem:[#allocation7] sm:$0xff] %v121
    // Predicated region
    $region22: #{tpu_custom_call.1} parent=1 // pred_check
      _
    $region23: #{tpu_custom_call.1} parent=1 // pred_check_branch
      %124 = sbr.rel (0) target = $region25
    $region24: #{tpu_custom_call.1} parent=1 // pred_region
      %s126 = ssub.s32 128, 128
      %127 = vsyncadd [#allocation4], %s126
      %s129 = sshll.u32 [#allocation7], 4
      %s130 = int_to_ptr.vmem [resolvable:$true] %s129
      %132 = dma.vmem_to_hbm [thread:$0]  %s130, 128, %s3, [#allocation4]
    $region25: #{tpu_custom_call.1} parent=1 // pred_fallthru
      _
    // Predicated region
    $region26: #{tpu_custom_call.1} parent=1 // pred_check
      _
    $region27: #{tpu_custom_call.1} parent=1 // pred_check_branch
      %134 = sbr.rel (0) target = $region29
    $region28: #{tpu_custom_call.1} parent=1 // pred_region
      %135 = dma.done [#allocation4], 128
    $region29: #{tpu_custom_call.1} parent=1 // pred_fallthru
      _
    %136 = vsyncpa [#allocation3], 1
    %137 = vsyncpa [#allocation6], 1
    %138 = vsyncpa [#allocation4], 1

</llo_original>
